<compile_context>
chip_gen: v5e
topology: v5e:2x2
jax: 0.10.0
libtpu: 0.0.40
codegen_flags: <defaults>
</compile_context>

<pallas_src>
import functools

import jax
import jax.numpy as jnp
from jax.experimental import pallas as pl
from jax.experimental.pallas import tpu as pltpu


# ---------------------------------------------------------------------------
# Fused kernel: ChebLSTM over all timesteps + time_Decay + MLP head.
# Grid = (B, T); h/c/decay-accumulator live in VMEM scratch across the T axis.
# ---------------------------------------------------------------------------
def _fused_cheblstm_kernel(x_ref, L_ref, scale_ref,
                           wc_ref, bc_ref,
                           mw1_ref, mb1_ref, mw2_ref, mb2_ref, mw3_ref, mb3_ref,
                           out_ref,
                           h_sc, c_sc, acc_sc, *, K, H):
    b = pl.program_id(0)
    t = pl.program_id(1)
    T = pl.num_programs(1)

    @pl.when(t == 0)
    def _():
        h_sc[...] = jnp.zeros_like(h_sc)
        c_sc[...] = jnp.zeros_like(c_sc)
        acc_sc[...] = jnp.zeros_like(acc_sc)

    x = x_ref[0, 0]                       # [N, Fin]   f32
    L = L_ref[0]                          # [N, N]     bf16
    h = h_sc[...]                         # [N, H]     f32
    c = c_sc[...]                         # [N, H]     f32

    # ChebConv1(x) + ChebConv2(h) fused into one recursion on feat = [x | h].
    feat = jnp.concatenate([x, h], axis=-1)           # [N, Fin+H] f32

    # Chebyshev recursion: T_0 = I, T_1 = L, T_k = 2 L T_{k-1} - T_{k-2},
    # applied to feat; terms stacked along the contraction axis.
    terms = [feat]
    if K > 1:
        t_prev = feat
        t_cur = jnp.dot(L, feat.astype(jnp.bfloat16),
                        preferred_element_type=jnp.float32)
        terms.append(t_cur)
        for _ in range(2, K):
            t_next = 2.0 * jnp.dot(L, t_cur.astype(jnp.bfloat16),
                                   preferred_element_type=jnp.float32) - t_prev
            t_prev, t_cur = t_cur, t_next
            terms.append(t_cur)
    stacked = jnp.concatenate(terms, axis=-1)         # [N, K*(Fin+H)] f32

    # Single big gate matmul (bf16 operands, f32 accumulation) + combined bias.
    gates = jnp.dot(stacked.astype(jnp.bfloat16), wc_ref[...],
                    preferred_element_type=jnp.float32) + bc_ref[...]   # [N, 4H]

    i_g = jax.nn.sigmoid(gates[:, 0 * H:1 * H])
    f_g = jax.nn.sigmoid(gates[:, 1 * H:2 * H])
    o_g = jax.nn.sigmoid(gates[:, 2 * H:3 * H])
    g_g = jnp.tanh(gates[:, 3 * H:4 * H])

    c_next = f_g * c + i_g * g_g
    h_next = o_g * jnp.tanh(c_next)

    h_sc[...] = h_next
    c_sc[...] = c_next

    # time_Decay: sum over nodes, scaled by rnn_index * (tii @ time_weight),
    # accumulated over timesteps (scale precomputed in the wrapper, in SMEM).
    scale = scale_ref[b, t]
    acc_sc[...] += scale * jnp.sum(h_next, axis=0, keepdims=True)   # [1, H]

    # MLP head (Linear -> ReLU, x3) as an epilogue on the last timestep.
    @pl.when(t == T - 1)
    def _():
        z = jnp.dot(acc_sc[...], mw1_ref[...],
                    preferred_element_type=jnp.float32) + mb1_ref[...]
        z = jnp.maximum(z, 0.0)
        z = jnp.dot(z, mw2_ref[...],
                    preferred_element_type=jnp.float32) + mb2_ref[...]
        z = jnp.maximum(z, 0.0)
        z = jnp.dot(z, mw3_ref[...],
                    preferred_element_type=jnp.float32) + mb3_ref[...]
        z = jnp.maximum(z, 0.0)
        out_ref[0] = z                                # [1, 1]


# ---------------------------------------------------------------------------
# Wrapper: weight fusion + one pallas_call.
# ---------------------------------------------------------------------------
def model_forward(params, input_tensor, graph, rnn_index, time_interval_index):
    # input_tensor: [T, B, N, Fin] (batch_first=False), graph: [B, N, N]
    T, B, N, Fin = input_tensor.shape
    K, _, four_h = params["cheb_w1"].shape
    H = four_h // 4
    d1 = params["mlp_w1"].shape[-1]
    d2 = params["mlp_w2"].shape[-1]

    # Fused Chebyshev weights: [K, Fin+H, 4H] -> [K*(Fin+H), 4H], bf16 for MXU.
    w_comb = jnp.concatenate([params["cheb_w1"], params["cheb_w2"]], axis=1)
    w_comb = w_comb.reshape(K * (Fin + H), 4 * H).astype(jnp.bfloat16)
    b_comb = (params["cheb_b1"] + params["cheb_b2"]).astype(jnp.float32)

    # Per-(b, t) decay scale, precomputed in plain JAX: [B, T]
    tscale = time_interval_index @ params["time_weight"]          # [B*T, 1]
    scale = (rnn_index * tscale).reshape(B, T).astype(jnp.float32)

    graph_bf16 = graph.astype(jnp.bfloat16)

    kernel = functools.partial(_fused_cheblstm_kernel, K=K, H=H)
    const = lambda shape: pl.BlockSpec(shape, lambda b, t, _s=len(shape): (0,) * _s)

    out = pl.pallas_call(
        kernel,
        out_shape=jax.ShapeDtypeStruct((B, 1, 1), jnp.float32),
        grid_spec=pltpu.PrefetchScalarGridSpec(
            num_scalar_prefetch=0,
            grid=(B, T),
            in_specs=[
                # x read directly in native [T, B, N, Fin] layout.
                pl.BlockSpec((1, 1, N, Fin), lambda b, t: (t, b, 0, 0)),
                # Laplacian: block index depends only on b -> fetched once per b.
                pl.BlockSpec((1, N, N), lambda b, t: (b, 0, 0)),
                # per-(b, t) decay scale table in SMEM (scalar reads).
                pl.BlockSpec(memory_space=pltpu.MemorySpace.SMEM),
                # fused ChebConv weights / bias (constant index map -> one DMA).
                const((K * (Fin + H), 4 * H)),
                const((1, 4 * H)),
                # MLP head weights.
                const((H, d1)), const((1, d1)),
                const((d1, d2)), const((1, d2)),
                const((d2, 1)), const((1, 1)),
            ],
            out_specs=pl.BlockSpec((1, 1, 1), lambda b, t: (b, 0, 0)),
            scratch_shapes=[
                pltpu.VMEM((N, H), jnp.float32),      # h state
                pltpu.VMEM((N, H), jnp.float32),      # c state
                pltpu.VMEM((1, H), jnp.float32),      # time_Decay accumulator
            ],
        ),
        compiler_params=pltpu.CompilerParams(
            dimension_semantics=("parallel", "arbitrary")),
    )(input_tensor, graph_bf16, scale, w_comb, b_comb,
      params["mlp_w1"], params["mlp_b1"],
      params["mlp_w2"], params["mlp_b2"],
      params["mlp_w3"], params["mlp_b3"])

    return out.reshape(B, 1)


# ---------------------------------------------------------------------------
# Deterministic setup + run
# ---------------------------------------------------------------------------
def make_params(key, fin, H, K, n_time_interval, dense1, dense2):
    # NOTE: the reference model is only self-consistent when the number of
    # graph nodes equals input_dim (init_hidden uses input_dim as node count),
    # so in the harness fin == N.
    ks = jax.random.split(key, 10)
    scale = 0.1
    return {
        "cheb_w1": scale * jax.random.normal(ks[0], (K, fin, 4 * H), jnp.float32),
        "cheb_b1": jnp.zeros((1, 4 * H), jnp.float32),
        "cheb_w2": scale * jax.random.normal(ks[1], (K, H, 4 * H), jnp.float32),
        "cheb_b2": jnp.zeros((1, 4 * H), jnp.float32),
        "time_weight": scale * jax.random.normal(ks[2], (n_time_interval, 1), jnp.float32),
        "mlp_w1": scale * jax.random.normal(ks[3], (H, dense1), jnp.float32),
        "mlp_b1": jnp.zeros((1, dense1), jnp.float32),
        "mlp_w2": scale * jax.random.normal(ks[4], (dense1, dense2), jnp.float32),
        "mlp_b2": jnp.zeros((1, dense2), jnp.float32),
        "mlp_w3": scale * jax.random.normal(ks[5], (dense2, 1), jnp.float32),
        "mlp_b3": jnp.zeros((1, 1), jnp.float32),
    }


def make_scaled_laplacian(key, B, N):
    # Random symmetric adjacency with self loops -> L_hat = L - I (lambda_max=2)
    a = (jax.random.uniform(key, (B, N, N)) > 0.7).astype(jnp.float32)
    a = jnp.maximum(a, jnp.transpose(a, (0, 2, 1)))
    a = a + jnp.eye(N, dtype=jnp.float32)[None]
    deg = jnp.sum(a, axis=-1)
    d_inv_sqrt = 1.0 / jnp.sqrt(deg)
    norm_adj = a * d_inv_sqrt[:, :, None] * d_inv_sqrt[:, None, :]
    return -norm_adj     # (I - norm_adj) - I


if __name__ == "__main__":
    # Small, forward-consistent shapes: number of graph nodes == input_dim == N
    B, T = 2, 4
    N = 16            # graph nodes == input_dim (cascade snapshot is N x N)
    H = 32            # hidden_dim  (4H = 128 -> gate matmul is lane-dense)
    K = 3             # Chebyshev order (kernel_size)
    n_time_interval = 6
    dense1, dense2 = 32, 16

    key = jax.random.PRNGKey(0)
    k_in, k_g, k_p, k_r, k_t = jax.random.split(key, 5)

    # input_tensor: (t, b, N, N)  (batch_first=False in the reference)
    input_tensor = jax.random.normal(k_in, (T, B, N, N), jnp.float32)
    graph = make_scaled_laplacian(k_g, B, N)                         # [B, N, N]
    params = make_params(k_p, N, H, K, n_time_interval, dense1, dense2)
    rnn_index = (jax.random.uniform(k_r, (B * T, 1)) > 0.2).astype(jnp.float32)
    time_interval_index = jax.nn.one_hot(
        jax.random.randint(k_t, (B * T,), 0, n_time_interval),
        n_time_interval, dtype=jnp.float32)                          # [B*T, n_ti]

    fwd = jax.jit(model_forward)
    pred = fwd(params, input_tensor, graph, rnn_index, time_interval_index)
    jax.block_until_ready(pred)

    assert pred.shape == (B, 1), pred.shape
    print("KERNEL_OK")
</pallas_src>

<mosaic_0001>
module attributes {stable_mosaic.version = 11 : i64} {
  func.func @_fused_cheblstm_kernel(%arg0: i32, %arg1: i32, %arg2: memref<1x1x16x16xf32, #tpu.memory_space<vmem>>, %arg3: memref<1x16x16xbf16, #tpu.memory_space<vmem>>, %arg4: memref<2x4xf32, #tpu.memory_space<smem>>, %arg5: memref<144x128xbf16, #tpu.memory_space<vmem>>, %arg6: memref<1x128xf32, #tpu.memory_space<vmem>>, %arg7: memref<32x32xf32, #tpu.memory_space<vmem>>, %arg8: memref<1x32xf32, #tpu.memory_space<vmem>>, %arg9: memref<32x16xf32, #tpu.memory_space<vmem>>, %arg10: memref<1x16xf32, #tpu.memory_space<vmem>>, %arg11: memref<16x1xf32, #tpu.memory_space<vmem>>, %arg12: memref<1x1xf32, #tpu.memory_space<vmem>>, %arg13: memref<1x1x1xf32, #tpu.memory_space<vmem>>, %arg14: memref<16x32xf32, #tpu.memory_space<vmem>>, %arg15: memref<16x32xf32, #tpu.memory_space<vmem>>, %arg16: memref<1x32xf32, #tpu.memory_space<vmem>>) attributes {dimension_semantics = [#tpu.dimension_semantics<parallel>, #tpu.dimension_semantics<arbitrary>], iteration_bounds = array<i64: 2, 4>, scalar_prefetch = 0 : i64, scratch_operands = 3 : i64, tpu.core_type = #tpu.core_type<tc>, window_params = [{transform_indices = @transform_0, window_bounds = array<i64: 1, 1, 16, 16>}, {transform_indices = @transform_1, window_bounds = array<i64: 1, 16, 16>}, {transform_indices = @transform_2, window_bounds = array<i64: 2, 4>}, {pipeline_mode = #tpu.pipeline_mode<synchronous>, transform_indices = @transform_3, window_bounds = array<i64: 144, 128>}, {pipeline_mode = #tpu.pipeline_mode<synchronous>, transform_indices = @transform_4, window_bounds = array<i64: 1, 128>}, {pipeline_mode = #tpu.pipeline_mode<synchronous>, transform_indices = @transform_5, window_bounds = array<i64: 32, 32>}, {pipeline_mode = #tpu.pipeline_mode<synchronous>, transform_indices = @transform_6, window_bounds = array<i64: 1, 32>}, {pipeline_mode = #tpu.pipeline_mode<synchronous>, transform_indices = @transform_7, window_bounds = array<i64: 32, 16>}, {pipeline_mode = #tpu.pipeline_mode<synchronous>, transform_indices = @transform_8, window_bounds = array<i64: 1, 16>}, {pipeline_mode = #tpu.pipeline_mode<synchronous>, transform_indices = @transform_9, window_bounds = array<i64: 16, 1>}, {pipeline_mode = #tpu.pipeline_mode<synchronous>, transform_indices = @transform_10, window_bounds = array<i64: 1, 1>}, {transform_indices = @transform_11, window_bounds = array<i64: 1, 1, 1>}]} {
    %c0_i32 = arith.constant 0 : i32
    %0 = arith.cmpi eq, %arg1, %c0_i32 : i32
    %1 = arith.extui %0 : i1 to i32
    %c0_i32_0 = arith.constant 0 : i32
    %2 = arith.cmpi ne, %1, %c0_i32_0 : i32
    scf.if %2 {
      %cst_31 = arith.constant 0.000000e+00 : f32
      %64 = vector.broadcast %cst_31 : f32 to vector<16x32xf32>
      %c0_32 = arith.constant 0 : index
      %c0_33 = arith.constant 0 : index
      %65 = vector.load %arg14[%c0_32, %c0_33] : memref<16x32xf32, #tpu.memory_space<vmem>>, vector<16x32xf32>
      tpu.vector_store %arg14[%c0_32, %c0_33], %64 {strides = array<i32>} : memref<16x32xf32, #tpu.memory_space<vmem>>, vector<16x32xf32>,
      %cst_34 = arith.constant 0.000000e+00 : f32
      %66 = vector.broadcast %cst_34 : f32 to vector<16x32xf32>
      %c0_35 = arith.constant 0 : index
      %c0_36 = arith.constant 0 : index
      %67 = vector.load %arg15[%c0_35, %c0_36] : memref<16x32xf32, #tpu.memory_space<vmem>>, vector<16x32xf32>
      tpu.vector_store %arg15[%c0_35, %c0_36], %66 {strides = array<i32>} : memref<16x32xf32, #tpu.memory_space<vmem>>, vector<16x32xf32>,
      %cst_37 = arith.constant 0.000000e+00 : f32
      %68 = vector.broadcast %cst_37 : f32 to vector<1x32xf32>
      %c0_38 = arith.constant 0 : index
      %c0_39 = arith.constant 0 : index
      %69 = vector.load %arg16[%c0_38, %c0_39] : memref<1x32xf32, #tpu.memory_space<vmem>>, vector<1x32xf32>
      tpu.vector_store %arg16[%c0_38, %c0_39], %68 {strides = array<i32>} : memref<1x32xf32, #tpu.memory_space<vmem>>, vector<1x32xf32>,
    } else {
    }
    %c0 = arith.constant 0 : index
    %c0_1 = arith.constant 0 : index
    %c0_2 = arith.constant 0 : index
    %c0_3 = arith.constant 0 : index
    %3 = vector.load %arg2[%c0, %c0_1, %c0_2, %c0_3] : memref<1x1x16x16xf32, #tpu.memory_space<vmem>>, vector<1x1x16x16xf32>
    %4 = vector.shape_cast %3 : vector<1x1x16x16xf32> to vector<16x16xf32>
    %c0_4 = arith.constant 0 : index
    %c0_5 = arith.constant 0 : index
    %c0_6 = arith.constant 0 : index
    %5 = vector.load %arg3[%c0_4, %c0_5, %c0_6] : memref<1x16x16xbf16, #tpu.memory_space<vmem>>, vector<1x16x16xbf16>
    %6 = vector.shape_cast %5 : vector<1x16x16xbf16> to vector<16x16xbf16>
    %c0_7 = arith.constant 0 : index
    %c0_8 = arith.constant 0 : index
    %7 = vector.load %arg14[%c0_7, %c0_8] : memref<16x32xf32, #tpu.memory_space<vmem>>, vector<16x32xf32>
    %c0_9 = arith.constant 0 : index
    %c0_10 = arith.constant 0 : index
    %8 = vector.load %arg15[%c0_9, %c0_10] : memref<16x32xf32, #tpu.memory_space<vmem>>, vector<16x32xf32>
    %9 = tpu.concatenate %4, %7 in 1 : vector<16x16xf32>, vector<16x32xf32> -> vector<16x48xf32>
    %10 = arith.truncf %9 : vector<16x48xf32> to vector<16x48xbf16>
    %cst = arith.constant dense<0.000000e+00> : vector<16x48xf32>
    %11 = tpu.matmul %6, %10, %cst {dimension_numbers = #tpu.dot_dimension_numbers<[1], [0], [0], [1], [0, 0, 1, 1], [], []>} : vector<16x16xbf16>, vector<16x48xbf16>, vector<16x48xf32> -> vector<16x48xf32>
    %12 = arith.truncf %11 : vector<16x48xf32> to vector<16x48xbf16>
    %cst_11 = arith.constant dense<0.000000e+00> : vector<16x48xf32>
    %13 = tpu.matmul %6, %12, %cst_11 {dimension_numbers = #tpu.dot_dimension_numbers<[1], [0], [0], [1], [0, 0, 1, 1], [], []>} : vector<16x16xbf16>, vector<16x48xbf16>, vector<16x48xf32> -> vector<16x48xf32>
    %cst_12 = arith.constant 2.000000e+00 : f32
    %14 = vector.broadcast %cst_12 : f32 to vector<16x48xf32>
    %15 = arith.mulf %14, %13 : vector<16x48xf32>
    %16 = arith.subf %15, %9 : vector<16x48xf32>
    %17 = tpu.concatenate %9, %11, %16 in 1 : vector<16x48xf32>, vector<16x48xf32>, vector<16x48xf32> -> vector<16x144xf32>
    %18 = arith.truncf %17 : vector<16x144xf32> to vector<16x144xbf16>
    %c0_13 = arith.constant 0 : index
    %c0_14 = arith.constant 0 : index
    %19 = vector.load %arg5[%c0_13, %c0_14] : memref<144x128xbf16, #tpu.memory_space<vmem>>, vector<144x128xbf16>
    %cst_15 = arith.constant dense<0.000000e+00> : vector<16x128xf32>
    %20 = tpu.matmul %18, %19, %cst_15 {dimension_numbers = #tpu.dot_dimension_numbers<[1], [0], [0], [1], [0, 0, 1, 1], [], []>} : vector<16x144xbf16>, vector<144x128xbf16>, vector<16x128xf32> -> vector<16x128xf32>
    %c0_16 = arith.constant 0 : index
    %c0_17 = arith.constant 0 : index
    %21 = vector.load %arg6[%c0_16, %c0_17] : memref<1x128xf32, #tpu.memory_space<vmem>>, vector<1x128xf32>
    %22 = vector.broadcast %21 : vector<1x128xf32> to vector<16x128xf32>
    %23 = arith.addf %20, %22 : vector<16x128xf32>
    %24 = vector.extract_strided_slice %23 {offsets = [0, 0], sizes = [16, 32], strides = [1, 1]} : vector<16x128xf32> to vector<16x32xf32>
    %25 = arith.negf %24 : vector<16x32xf32>
    %26 = math.exp %25 : vector<16x32xf32>
    %cst_18 = arith.constant 1.000000e+00 : f32
    %27 = vector.broadcast %cst_18 : f32 to vector<16x32xf32>
    %28 = arith.addf %27, %26 : vector<16x32xf32>
    %29 = arith.divf %27, %28 : vector<16x32xf32>
    %30 = vector.extract_strided_slice %23 {offsets = [0, 32], sizes = [16, 32], strides = [1, 1]} : vector<16x128xf32> to vector<16x32xf32>
    %31 = arith.negf %30 : vector<16x32xf32>
    %32 = math.exp %31 : vector<16x32xf32>
    %cst_19 = arith.constant 1.000000e+00 : f32
    %33 = vector.broadcast %cst_19 : f32 to vector<16x32xf32>
    %34 = arith.addf %33, %32 : vector<16x32xf32>
    %35 = arith.divf %33, %34 : vector<16x32xf32>
    %36 = vector.extract_strided_slice %23 {offsets = [0, 64], sizes = [16, 32], strides = [1, 1]} : vector<16x128xf32> to vector<16x32xf32>
    %37 = arith.negf %36 : vector<16x32xf32>
    %38 = math.exp %37 : vector<16x32xf32>
    %cst_20 = arith.constant 1.000000e+00 : f32
    %39 = vector.broadcast %cst_20 : f32 to vector<16x32xf32>
    %40 = arith.addf %39, %38 : vector<16x32xf32>
    %41 = arith.divf %39, %40 : vector<16x32xf32>
    %42 = vector.extract_strided_slice %23 {offsets = [0, 96], sizes = [16, 32], strides = [1, 1]} : vector<16x128xf32> to vector<16x32xf32>
    %43 = math.tanh %42 : vector<16x32xf32>
    %44 = arith.mulf %35, %8 : vector<16x32xf32>
    %45 = arith.mulf %29, %43 : vector<16x32xf32>
    %46 = arith.addf %44, %45 : vector<16x32xf32>
    %47 = math.tanh %46 : vector<16x32xf32>
    %48 = arith.mulf %41, %47 : vector<16x32xf32>
    %c0_21 = arith.constant 0 : index
    %c0_22 = arith.constant 0 : index
    %49 = vector.load %arg14[%c0_21, %c0_22] : memref<16x32xf32, #tpu.memory_space<vmem>>, vector<16x32xf32>
    tpu.vector_store %arg14[%c0_21, %c0_22], %48 {strides = array<i32>} : memref<16x32xf32, #tpu.memory_space<vmem>>, vector<16x32xf32>,
    %c0_23 = arith.constant 0 : index
    %c0_24 = arith.constant 0 : index
    %50 = vector.load %arg15[%c0_23, %c0_24] : memref<16x32xf32, #tpu.memory_space<vmem>>, vector<16x32xf32>
    tpu.vector_store %arg15[%c0_23, %c0_24], %46 {strides = array<i32>} : memref<16x32xf32, #tpu.memory_space<vmem>>, vector<16x32xf32>,
    %51 = arith.index_cast %arg0 : i32 to index
    %52 = arith.index_cast %arg1 : i32 to index
    %53 = memref.load %arg4[%51, %52] : memref<2x4xf32, #tpu.memory_space<smem>>
    %c0_25 = arith.constant 0 : index
    %c0_26 = arith.constant 0 : index
    %54 = vector.load %arg16[%c0_25, %c0_26] : memref<1x32xf32, #tpu.memory_space<vmem>>, vector<1x32xf32>
    %cst_27 = arith.constant dense<0.000000e+00> : vector<32xf32>
    %55 = vector.multi_reduction <add>, %48, %cst_27 [0] : vector<16x32xf32> to vector<32xf32>
    %56 = vector.shape_cast %55 : vector<32xf32> to vector<1x32xf32>
    %57 = vector.broadcast %53 : f32 to vector<1x32xf32>
    %58 = arith.mulf %57, %56 : vector<1x32xf32>
    %59 = arith.addf %54, %58 : vector<1x32xf32>
    %c0_28 = arith.constant 0 : index
    %c0_29 = arith.constant 0 : index
    %60 = vector.load %arg16[%c0_28, %c0_29] : memref<1x32xf32, #tpu.memory_space<vmem>>, vector<1x32xf32>
    tpu.vector_store %arg16[%c0_28, %c0_29], %59 {strides = array<i32>} : memref<1x32xf32, #tpu.memory_space<vmem>>, vector<1x32xf32>,
    %c3_i32 = arith.constant 3 : i32
    %61 = arith.cmpi eq, %arg1, %c3_i32 : i32
    %62 = arith.extui %61 : i1 to i32
    %c0_i32_30 = arith.constant 0 : i32
    %63 = arith.cmpi ne, %62, %c0_i32_30 : i32
    scf.if %63 {
      %c0_31 = arith.constant 0 : index
      %c0_32 = arith.constant 0 : index
      %64 = vector.load %arg16[%c0_31, %c0_32] : memref<1x32xf32, #tpu.memory_space<vmem>>, vector<1x32xf32>
      %c0_33 = arith.constant 0 : index
      %c0_34 = arith.constant 0 : index
      %65 = vector.load %arg7[%c0_33, %c0_34] : memref<32x32xf32, #tpu.memory_space<vmem>>, vector<32x32xf32>
      %cst_35 = arith.constant dense<0.000000e+00> : vector<1x32xf32>
      %66 = tpu.matmul %64, %65, %cst_35 {dimension_numbers = #tpu.dot_dimension_numbers<[1], [0], [0], [1], [0, 0, 1, 1], [], []>} : vector<1x32xf32>, vector<32x32xf32>, vector<1x32xf32> -> vector<1x32xf32>
      %c0_36 = arith.constant 0 : index
      %c0_37 = arith.constant 0 : index
      %67 = vector.load %arg8[%c0_36, %c0_37] : memref<1x32xf32, #tpu.memory_space<vmem>>, vector<1x32xf32>
      %68 = arith.addf %66, %67 : vector<1x32xf32>
      %cst_38 = arith.constant 0.000000e+00 : f32
      %69 = vector.broadcast %cst_38 : f32 to vector<1x32xf32>
      %70 = arith.maximumf %68, %69 : vector<1x32xf32>
      %c0_39 = arith.constant 0 : index
      %c0_40 = arith.constant 0 : index
      %71 = vector.load %arg9[%c0_39, %c0_40] : memref<32x16xf32, #tpu.memory_space<vmem>>, vector<32x16xf32>
      %cst_41 = arith.constant dense<0.000000e+00> : vector<1x16xf32>
      %72 = tpu.matmul %70, %71, %cst_41 {dimension_numbers = #tpu.dot_dimension_numbers<[1], [0], [0], [1], [0, 0, 1, 1], [], []>} : vector<1x32xf32>, vector<32x16xf32>, vector<1x16xf32> -> vector<1x16xf32>
      %c0_42 = arith.constant 0 : index
      %c0_43 = arith.constant 0 : index
      %73 = vector.load %arg10[%c0_42, %c0_43] : memref<1x16xf32, #tpu.memory_space<vmem>>, vector<1x16xf32>
      %74 = arith.addf %72, %73 : vector<1x16xf32>
      %cst_44 = arith.constant 0.000000e+00 : f32
      %75 = vector.broadcast %cst_44 : f32 to vector<1x16xf32>
      %76 = arith.maximumf %74, %75 : vector<1x16xf32>
      %c0_45 = arith.constant 0 : index
      %c0_46 = arith.constant 0 : index
      %77 = vector.load %arg11[%c0_45, %c0_46] : memref<16x1xf32, #tpu.memory_space<vmem>>, vector<16x1xf32>
      %cst_47 = arith.constant dense<0.000000e+00> : vector<1x1xf32>
      %78 = tpu.matmul %76, %77, %cst_47 {dimension_numbers = #tpu.dot_dimension_numbers<[1], [0], [0], [1], [0, 0, 1, 1], [], []>} : vector<1x16xf32>, vector<16x1xf32>, vector<1x1xf32> -> vector<1x1xf32>
      %c0_48 = arith.constant 0 : index
      %c0_49 = arith.constant 0 : index
      %79 = vector.load %arg12[%c0_48, %c0_49] : memref<1x1xf32, #tpu.memory_space<vmem>>, vector<1x1xf32>
      %80 = arith.addf %78, %79 : vector<1x1xf32>
      %cst_50 = arith.constant 0.000000e+00 : f32
      %81 = vector.broadcast %cst_50 : f32 to vector<1x1xf32>
      %82 = arith.maximumf %80, %81 : vector<1x1xf32>
      %c0_51 = arith.constant 0 : index
      %c0_52 = arith.constant 0 : index
      %c0_53 = arith.constant 0 : index
      %83 = vector.load %arg13[%c0_51, %c0_52, %c0_53] : memref<1x1x1xf32, #tpu.memory_space<vmem>>, vector<1x1x1xf32>
      %84 = vector.shape_cast %83 : vector<1x1x1xf32> to vector<1x1xf32>
      %85 = vector.shape_cast %82 : vector<1x1xf32> to vector<1x1x1xf32>
      tpu.vector_store %arg13[%c0_51, %c0_52, %c0_53], %85 {strides = array<i32>} : memref<1x1x1xf32, #tpu.memory_space<vmem>>, vector<1x1x1xf32>,
    } else {
    }
    return
  }
  func.func @transform_0(%arg0: i32, %arg1: i32) -> (i32, i32, i32, i32) {
    %c0_i32 = arith.constant 0 : i32
    %c0_i32_0 = arith.constant 0 : i32
    %c0_i32_1 = arith.constant 0 : i32
    return %arg1, %arg0, %c0_i32, %c0_i32_0 : i32, i32, i32, i32
  }
  func.func @transform_1(%arg0: i32, %arg1: i32) -> (i32, i32, i32) {
    %c0_i32 = arith.constant 0 : i32
    %c0_i32_0 = arith.constant 0 : i32
    %c0_i32_1 = arith.constant 0 : i32
    return %arg0, %c0_i32, %c0_i32_0 : i32, i32, i32
  }
  func.func @transform_2(%arg0: i32, %arg1: i32) -> (i32, i32) {
    %c0_i32 = arith.constant 0 : i32
    %c0_i32_0 = arith.constant 0 : i32
    %c0_i32_1 = arith.constant 0 : i32
    return %c0_i32, %c0_i32_0 : i32, i32
  }
  func.func @transform_3(%arg0: i32, %arg1: i32) -> (i32, i32) {
    %c0_i32 = arith.constant 0 : i32
    %c0_i32_0 = arith.constant 0 : i32
    %c0_i32_1 = arith.constant 0 : i32
    return %c0_i32, %c0_i32_0 : i32, i32
  }
  func.func @transform_4(%arg0: i32, %arg1: i32) -> (i32, i32) {
    %c0_i32 = arith.constant 0 : i32
    %c0_i32_0 = arith.constant 0 : i32
    %c0_i32_1 = arith.constant 0 : i32
    return %c0_i32, %c0_i32_0 : i32, i32
  }
  func.func @transform_5(%arg0: i32, %arg1: i32) -> (i32, i32) {
    %c0_i32 = arith.constant 0 : i32
    %c0_i32_0 = arith.constant 0 : i32
    %c0_i32_1 = arith.constant 0 : i32
    return %c0_i32, %c0_i32_0 : i32, i32
  }
  func.func @transform_6(%arg0: i32, %arg1: i32) -> (i32, i32) {
    %c0_i32 = arith.constant 0 : i32
    %c0_i32_0 = arith.constant 0 : i32
    %c0_i32_1 = arith.constant 0 : i32
    return %c0_i32, %c0_i32_0 : i32, i32
  }
  func.func @transform_7(%arg0: i32, %arg1: i32) -> (i32, i32) {
    %c0_i32 = arith.constant 0 : i32
    %c0_i32_0 = arith.constant 0 : i32
    %c0_i32_1 = arith.constant 0 : i32
    return %c0_i32, %c0_i32_0 : i32, i32
  }
  func.func @transform_8(%arg0: i32, %arg1: i32) -> (i32, i32) {
    %c0_i32 = arith.constant 0 : i32
    %c0_i32_0 = arith.constant 0 : i32
    %c0_i32_1 = arith.constant 0 : i32
    return %c0_i32, %c0_i32_0 : i32, i32
  }
  func.func @transform_9(%arg0: i32, %arg1: i32) -> (i32, i32) {
    %c0_i32 = arith.constant 0 : i32
    %c0_i32_0 = arith.constant 0 : i32
    %c0_i32_1 = arith.constant 0 : i32
    return %c0_i32, %c0_i32_0 : i32, i32
  }
  func.func @transform_10(%arg0: i32, %arg1: i32) -> (i32, i32) {
    %c0_i32 = arith.constant 0 : i32
    %c0_i32_0 = arith.constant 0 : i32
    %c0_i32_1 = arith.constant 0 : i32
    return %c0_i32, %c0_i32_0 : i32, i32
  }
  func.func @transform_11(%arg0: i32, %arg1: i32) -> (i32, i32, i32) {
    %c0_i32 = arith.constant 0 : i32
    %c0_i32_0 = arith.constant 0 : i32
    %c0_i32_1 = arith.constant 0 : i32
    return %arg0, %c0_i32, %c0_i32_0 : i32, i32, i32
  }
}

</mosaic_0001>

<llo_original>
// kernel: model_forward.1
$region0: #{model_forward.1}
  #allocation0 [shape = 'u32[]', space=smem, size = 0x4, offset = 0x4, fixed_abs, tag = 'smem constant byte address 0x4 - core index']
  #allocation1 [shape = 'u32[72,128]{1,0:T(1,128)}', space=vmem, size = 0x9000, scoped, tag = 'internal scratch']
  #allocation2 [shape = 'f32[16,32]{1,0:T(8,128)}', space=vmem, size = 0x2000, scoped, tag = 'scratch operand']
  #allocation3 [shape = 'f32[16,32]{1,0:T(8,128)}', space=vmem, size = 0x2000, scoped, tag = 'scratch operand']
  #allocation4 [shape = 'f32[1,32]{1,0:T(1,128)}', space=vmem, size = 0x200, scoped, tag = 'scratch operand']
  #allocation5 [shape = 'f32[1,1]{1,0:T(1,128)S(1)}', space=vmem, size = 0x200, scoped, tag = 'scoped memory for model_forward.1']
  %s0 = inlined_call_operand.vmem [shape: f32[4,2,16,16], index: 0, kind: input, shape index: {}]
  %s1 = inlined_call_operand.vmem [shape: bf16[2,16,16], index: 1, kind: input, shape index: {}]
  %s2 = inlined_call_operand.vmem [shape: f32[2,4], index: 2, kind: input, shape index: {}]
  %s3 = inlined_call_operand.vmem [shape: bf16[144,128], index: 3, kind: input, shape index: {}]
  %s4 = inlined_call_operand.vmem [shape: f32[1,128], index: 4, kind: input, shape index: {}]
  %s5 = inlined_call_operand.vmem [shape: f32[32,32], index: 5, kind: input, shape index: {}]
  %s6 = inlined_call_operand.vmem [shape: f32[1,32], index: 6, kind: input, shape index: {}]
  %s7 = inlined_call_operand.vmem [shape: f32[32,16], index: 7, kind: input, shape index: {}]
  %s8 = inlined_call_operand.vmem [shape: f32[1,16], index: 8, kind: input, shape index: {}]
  %s9 = inlined_call_operand.vmem [shape: f32[16,1], index: 9, kind: input, shape index: {}]
  %s10 = inlined_call_operand.<no memory space> [shape: f32[1,1], index: 10, kind: input, shape index: {}]
  %s11 = inlined_call_operand.vmem [shape: f32[2,1,1], index: 11, kind: output, shape index: {}]
  %s12 = sld [smem:[#allocation0]]
  $region89: #{model_forward.1} parent=0
    _
  %s14 = ssub.s32 1, %s12
  %s15 = scalar_select 0, %s14, %s12
  %v16 = vstv %s10
  %17 = vst [vmem:[#allocation5] sm:$0x1] %v16
  $region1: #{model_forward.1} parent=0
    #allocation6 [shape = 'u8[1024]{0}', space=smem, size = 0x400, scoped, tag = 'input window, operand 2, single buffered']
    #allocation7 [shape = 's32[2]{0}', space=sflag, size = 0x8, scoped, tag = 'scoped memory for model_forward.1']
    %18 = vsyncpa [#allocation7], 0
    loop: start=0, step=1, limit=10
    $region2: #{model_forward.1} parent=1 // loop_pre_header
      _
    $region3: #{model_forward.1} parent=1 // loop_header
      %s20 = sphi 0, %s24
      %p21 = scmp.ge.s32.totalorder %s20, 10
      %s27 = sphi 0, %s39
      %s28 = sphi 0, %s35
      %s29 = sphi 0, %s27
      %s30 = sphi 0, %s28
      %s31 = sphi 0, %s29
      %s32 = sphi 0, %s30
      %s44 = sphi 0, %s46
      %s47 = sphi 0, %s44
      %s48 = sphi 0, %s47
      %s64 = sphi 0, %s48
      %s70 = sphi 0, %s72
      %s73 = sphi 0, %s70
      %s74 = sphi 0, %s73
      %s90 = sphi 0, %s74
      %s94 = sphi 0, %s94
      %s96 = sphi 0, %s94
      %s97 = sphi 0, %s96
      %s111 = sphi 0, %s97
      %s115 = sphi 0, %s115
      %s117 = sphi 0, %s115
      %s118 = sphi 0, %s117
      %s132 = sphi 0, %s118
      %s136 = sphi 0, %s136
      %s138 = sphi 0, %s136
      %s139 = sphi 0, %s138
      %s153 = sphi 0, %s139
      %s157 = sphi 0, %s157
      %s159 = sphi 0, %s157
      %s160 = sphi 0, %s159
      %s174 = sphi 0, %s160
      %s178 = sphi 0, %s178
      %s180 = sphi 0, %s178
      %s181 = sphi 0, %s180
      %s195 = sphi 0, %s181
      %s199 = sphi 0, %s199
      %s201 = sphi 0, %s199
      %s202 = sphi 0, %s201
      %s216 = sphi 0, %s202
      %s220 = sphi 0, %s220
      %s222 = sphi 0, %s220
      %s223 = sphi 0, %s222
      %s237 = sphi 0, %s223
      %s241 = sphi 0, %s241
      %s243 = sphi 0, %s241
      %s244 = sphi 0, %s243
      %s258 = sphi 0, %s244
      %s262 = sphi 0, %s262
      %s264 = sphi 0, %s262
      %s265 = sphi 0, %s264
      %s279 = sphi 0, %s265
      %s285 = sphi 0, %s287
      %s288 = sphi 0, %s285
      %s289 = sphi 0, %s288
      %s305 = sphi 0, %s289
    $region4: #{model_forward.1} parent=1 // loop_header_branch
      %23 = sbr.rel (%p21) target = $region8
    $region5: #{model_forward.1} parent=1 // loop_body
      %s25 = ssub.s32 %s20, 1
      %s26 = ssub.s32 %s20, 2
      %s33 = sadd.s32 1, %s28
      %p34 = scmp.ge.s32.totalorder %s33, 4
      %s35 = scalar_select %p34, 0, %s33
      %s36 = sadd.s32 1, %s27
      %s37 = scalar_select %p34, %s36, %s27
      %p38 = scmp.ge.s32.totalorder %s37, 2
      %s39 = scalar_select %p38, 0, %s37
      %s40 = ssub.s32 %s28, %s35
      %s41 = ssub.s32 %s27, %s39
      %s42 = sor.u32 %s40, %s41
      %p43 = scmp.eq.s32.totalorder %s42, 0
      %s45 = sadd.s32 %s44, 1
      %s46 = scalar_select %p43, %s44, %s45
      %p49 = pneg %p43
      %p50 = scmp.eq.s32.totalorder %s20, 7
      %p51 = por %p49, %p50
      %p52 = scmp.ne.s32.totalorder %s44, %s47
      %p53 = scmp.eq.s32.totalorder %s20, 0
      %p54 = por %p52, %p53
      %p55 = scmp.ne.s32.totalorder %s44, %s47
      %p56 = scmp.eq.s32.totalorder %s25, 7
      %p57 = por %p55, %p56
      %p58 = scmp.ne.s32.totalorder %s47, %s48
      %p59 = scmp.eq.s32.totalorder %s25, 0
      %p60 = por %p58, %p59
      %p61 = scmp.ne.s32.totalorder %s47, %s48
      %p62 = scmp.eq.s32.totalorder %s26, 7
      %p63 = por %p61, %p62
      %p65 = scmp.ne.s32.totalorder %s48, %s64
      %p66 = scmp.eq.s32.totalorder %s26, 0
      %p67 = por %p65, %p66
      %s68 = ssub.s32 %s27, %s39
      %p69 = scmp.eq.s32.totalorder %s68, 0
      %s71 = sadd.s32 %s70, 1
      %s72 = scalar_select %p69, %s70, %s71
      %p75 = pneg %p69
      %p76 = scmp.eq.s32.totalorder %s20, 7
      %p77 = por %p75, %p76
      %p78 = scmp.ne.s32.totalorder %s70, %s73
      %p79 = scmp.eq.s32.totalorder %s20, 0
      %p80 = por %p78, %p79
      %p81 = scmp.ne.s32.totalorder %s70, %s73
      %p82 = scmp.eq.s32.totalorder %s25, 7
      %p83 = por %p81, %p82
      %p84 = scmp.ne.s32.totalorder %s73, %s74
      %p85 = scmp.eq.s32.totalorder %s25, 0
      %p86 = por %p84, %p85
      %p87 = scmp.ne.s32.totalorder %s73, %s74
      %p88 = scmp.eq.s32.totalorder %s26, 7
      %p89 = por %p87, %p88
      %p91 = scmp.ne.s32.totalorder %s74, %s90
      %p92 = scmp.eq.s32.totalorder %s26, 0
      %p93 = por %p91, %p92
      %s95 = sadd.s32 %s94, 1
      %p98 = scmp.eq.s32.totalorder %s20, 7
      %p99 = scmp.ne.s32.totalorder %s94, %s96
      %p100 = scmp.eq.s32.totalorder %s20, 0
      %p101 = por %p99, %p100
      %p102 = scmp.ne.s32.totalorder %s94, %s96
      %p103 = scmp.eq.s32.totalorder %s25, 7
      %p104 = por %p102, %p103
      %p105 = scmp.ne.s32.totalorder %s96, %s97
      %p106 = scmp.eq.s32.totalorder %s25, 0
      %p107 = por %p105, %p106
      %p108 = scmp.ne.s32.totalorder %s96, %s97
      %p109 = scmp.eq.s32.totalorder %s26, 7
      %p110 = por %p108, %p109
      %p112 = scmp.ne.s32.totalorder %s97, %s111
      %p113 = scmp.eq.s32.totalorder %s26, 0
      %p114 = por %p112, %p113
      %s116 = sadd.s32 %s115, 1
      %p119 = scmp.eq.s32.totalorder %s20, 7
      %p120 = scmp.ne.s32.totalorder %s115, %s117
      %p121 = scmp.eq.s32.totalorder %s20, 0
      %p122 = por %p120, %p121
      %p123 = scmp.ne.s32.totalorder %s115, %s117
      %p124 = scmp.eq.s32.totalorder %s25, 7
      %p125 = por %p123, %p124
      %p126 = scmp.ne.s32.totalorder %s117, %s118
      %p127 = scmp.eq.s32.totalorder %s25, 0
      %p128 = por %p126, %p127
      %p129 = scmp.ne.s32.totalorder %s117, %s118
      %p130 = scmp.eq.s32.totalorder %s26, 7
      %p131 = por %p129, %p130
      %p133 = scmp.ne.s32.totalorder %s118, %s132
      %p134 = scmp.eq.s32.totalorder %s26, 0
      %p135 = por %p133, %p134
      %s137 = sadd.s32 %s136, 1
      %p140 = scmp.eq.s32.totalorder %s20, 7
      %p141 = scmp.ne.s32.totalorder %s136, %s138
      %p142 = scmp.eq.s32.totalorder %s20, 0
      %p143 = por %p141, %p142
      %p144 = scmp.ne.s32.totalorder %s136, %s138
      %p145 = scmp.eq.s32.totalorder %s25, 7
      %p146 = por %p144, %p145
      %p147 = scmp.ne.s32.totalorder %s138, %s139
      %p148 = scmp.eq.s32.totalorder %s25, 0
      %p149 = por %p147, %p148
      %p150 = scmp.ne.s32.totalorder %s138, %s139
      %p151 = scmp.eq.s32.totalorder %s26, 7
      %p152 = por %p150, %p151
      %p154 = scmp.ne.s32.totalorder %s139, %s153
      %p155 = scmp.eq.s32.totalorder %s26, 0
      %p156 = por %p154, %p155
      %s158 = sadd.s32 %s157, 1
      %p161 = scmp.eq.s32.totalorder %s20, 7
      %p162 = scmp.ne.s32.totalorder %s157, %s159
      %p163 = scmp.eq.s32.totalorder %s20, 0
      %p164 = por %p162, %p163
      %p165 = scmp.ne.s32.totalorder %s157, %s159
      %p166 = scmp.eq.s32.totalorder %s25, 7
      %p167 = por %p165, %p166
      %p168 = scmp.ne.s32.totalorder %s159, %s160
      %p169 = scmp.eq.s32.totalorder %s25, 0
      %p170 = por %p168, %p169
      %p171 = scmp.ne.s32.totalorder %s159, %s160
      %p172 = scmp.eq.s32.totalorder %s26, 7
      %p173 = por %p171, %p172
      %p175 = scmp.ne.s32.totalorder %s160, %s174
      %p176 = scmp.eq.s32.totalorder %s26, 0
      %p177 = por %p175, %p176
      %s179 = sadd.s32 %s178, 1
      %p182 = scmp.eq.s32.totalorder %s20, 7
      %p183 = scmp.ne.s32.totalorder %s178, %s180
      %p184 = scmp.eq.s32.totalorder %s20, 0
      %p185 = por %p183, %p184
      %p186 = scmp.ne.s32.totalorder %s178, %s180
      %p187 = scmp.eq.s32.totalorder %s25, 7
      %p188 = por %p186, %p187
      %p189 = scmp.ne.s32.totalorder %s180, %s181
      %p190 = scmp.eq.s32.totalorder %s25, 0
      %p191 = por %p189, %p190
      %p192 = scmp.ne.s32.totalorder %s180, %s181
      %p193 = scmp.eq.s32.totalorder %s26, 7
      %p194 = por %p192, %p193
      %p196 = scmp.ne.s32.totalorder %s181, %s195
      %p197 = scmp.eq.s32.totalorder %s26, 0
      %p198 = por %p196, %p197
      %s200 = sadd.s32 %s199, 1
      %p203 = scmp.eq.s32.totalorder %s20, 7
      %p204 = scmp.ne.s32.totalorder %s199, %s201
      %p205 = scmp.eq.s32.totalorder %s20, 0
      %p206 = por %p204, %p205
      %p207 = scmp.ne.s32.totalorder %s199, %s201
      %p208 = scmp.eq.s32.totalorder %s25, 7
      %p209 = por %p207, %p208
      %p210 = scmp.ne.s32.totalorder %s201, %s202
      %p211 = scmp.eq.s32.totalorder %s25, 0
      %p212 = por %p210, %p211
      %p213 = scmp.ne.s32.totalorder %s201, %s202
      %p214 = scmp.eq.s32.totalorder %s26, 7
      %p215 = por %p213, %p214
      %p217 = scmp.ne.s32.totalorder %s202, %s216
      %p218 = scmp.eq.s32.totalorder %s26, 0
      %p219 = por %p217, %p218
      %s221 = sadd.s32 %s220, 1
      %p224 = scmp.eq.s32.totalorder %s20, 7
      %p225 = scmp.ne.s32.totalorder %s220, %s222
      %p226 = scmp.eq.s32.totalorder %s20, 0
      %p227 = por %p225, %p226
      %p228 = scmp.ne.s32.totalorder %s220, %s222
      %p229 = scmp.eq.s32.totalorder %s25, 7
      %p230 = por %p228, %p229
      %p231 = scmp.ne.s32.totalorder %s222, %s223
      %p232 = scmp.eq.s32.totalorder %s25, 0
      %p233 = por %p231, %p232
      %p234 = scmp.ne.s32.totalorder %s222, %s223
      %p235 = scmp.eq.s32.totalorder %s26, 7
      %p236 = por %p234, %p235
      %p238 = scmp.ne.s32.totalorder %s223, %s237
      %p239 = scmp.eq.s32.totalorder %s26, 0
      %p240 = por %p238, %p239
      %s242 = sadd.s32 %s241, 1
      %p245 = scmp.eq.s32.totalorder %s20, 7
      %p246 = scmp.ne.s32.totalorder %s241, %s243
      %p247 = scmp.eq.s32.totalorder %s20, 0
      %p248 = por %p246, %p247
      %p249 = scmp.ne.s32.totalorder %s241, %s243
      %p250 = scmp.eq.s32.totalorder %s25, 7
      %p251 = por %p249, %p250
      %p252 = scmp.ne.s32.totalorder %s243, %s244
      %p253 = scmp.eq.s32.totalorder %s25, 0
      %p254 = por %p252, %p253
      %p255 = scmp.ne.s32.totalorder %s243, %s244
      %p256 = scmp.eq.s32.totalorder %s26, 7
      %p257 = por %p255, %p256
      %p259 = scmp.ne.s32.totalorder %s244, %s258
      %p260 = scmp.eq.s32.totalorder %s26, 0
      %p261 = por %p259, %p260
      %s263 = sadd.s32 %s262, 1
      %p266 = scmp.eq.s32.totalorder %s20, 7
      %p267 = scmp.ne.s32.totalorder %s262, %s264
      %p268 = scmp.eq.s32.totalorder %s20, 0
      %p269 = por %p267, %p268
      %p270 = scmp.ne.s32.totalorder %s262, %s264
      %p271 = scmp.eq.s32.totalorder %s25, 7
      %p272 = por %p270, %p271
      %p273 = scmp.ne.s32.totalorder %s264, %s265
      %p274 = scmp.eq.s32.totalorder %s25, 0
      %p275 = por %p273, %p274
      %p276 = scmp.ne.s32.totalorder %s264, %s265
      %p277 = scmp.eq.s32.totalorder %s26, 7
      %p278 = por %p276, %p277
      %p280 = scmp.ne.s32.totalorder %s265, %s279
      %p281 = scmp.eq.s32.totalorder %s26, 0
      %p282 = por %p280, %p281
      %s283 = ssub.s32 %s27, %s39
      %p284 = scmp.eq.s32.totalorder %s283, 0
      %s286 = sadd.s32 %s285, 1
      %s287 = scalar_select %p284, %s285, %s286
      %p290 = pneg %p284
      %p291 = scmp.eq.s32.totalorder %s20, 7
      %p292 = por %p290, %p291
      %p293 = scmp.ne.s32.totalorder %s285, %s288
      %p294 = scmp.eq.s32.totalorder %s20, 0
      %p295 = por %p293, %p294
      %p296 = scmp.ne.s32.totalorder %s285, %s288
      %p297 = scmp.eq.s32.totalorder %s25, 7
      %p298 = por %p296, %p297
      %p299 = scmp.ne.s32.totalorder %s288, %s289
      %p300 = scmp.eq.s32.totalorder %s25, 0
      %p301 = por %p299, %p300
      %p302 = scmp.ne.s32.totalorder %s288, %s289
      %p303 = scmp.eq.s32.totalorder %s26, 7
      %p304 = por %p302, %p303
      %p306 = scmp.ne.s32.totalorder %s289, %s305
      %p307 = scmp.eq.s32.totalorder %s26, 0
      %p308 = por %p306, %p307
      %p309 = scmp.le.s32.totalorder 1, %s20
      %p310 = scmp.lt.s32.totalorder %s20, 9
      %p311 = pnand %p309, %p310
      %p312 = pneg %p311
      // Predicated region
      $region9: #{model_forward.1} parent=5 // pred_check
        _
      $region10: #{model_forward.1} parent=5 // pred_check_branch
        %314 = sbr.rel (%p311) target = $region12
      $region11: #{model_forward.1} parent=5 // pred_region
        %s315 = ssub.s32 %s20, 1
        // Predicated region
        $region13: #{model_forward.1} parent=11 // pred_check
          %p316 = pneg %p107
        $region14: #{model_forward.1} parent=11 // pred_check_branch
          %318 = sbr.rel (%p316) target = $region16
        $region15: #{model_forward.1} parent=11 // pred_region
          %320 = vsyncadd [#allocation7], 0
          %s322 = sshll.u32 %s2, 4
          %s323 = int_to_ptr.vmem [resolvable:$true] %s322
          %325 = dma.vmem_to_smem %s323, 32, [#allocation6], [#allocation7]
        $region16: #{model_forward.1} parent=11 // pred_fallthru
          _
        // Predicated region
        $region17: #{model_forward.1} parent=11 // pred_check
          %p326 = pneg %p128
        $region18: #{model_forward.1} parent=11 // pred_check_branch
          %328 = sbr.rel (%p326) target = $region20
        $region19: #{model_forward.1} parent=11 // pred_region
          _
        $region20: #{model_forward.1} parent=11 // pred_fallthru
          _
        // Predicated region
        $region21: #{model_forward.1} parent=11 // pred_check
          %p329 = pneg %p149
        $region22: #{model_forward.1} parent=11 // pred_check_branch
          %331 = sbr.rel (%p329) target = $region24
        $region23: #{model_forward.1} parent=11 // pred_region
          _
        $region24: #{model_forward.1} parent=11 // pred_fallthru
          _
        // Predicated region
        $region25: #{model_forward.1} parent=11 // pred_check
          %p332 = pneg %p170
        $region26: #{model_forward.1} parent=11 // pred_check_branch
          %334 = sbr.rel (%p332) target = $region28
        $region27: #{model_forward.1} parent=11 // pred_region
          _
        $region28: #{model_forward.1} parent=11 // pred_fallthru
          _
        // Predicated region
        $region29: #{model_forward.1} parent=11 // pred_check
          %p335 = pneg %p191
        $region30: #{model_forward.1} parent=11 // pred_check_branch
          %337 = sbr.rel (%p335) target = $region32
        $region31: #{model_forward.1} parent=11 // pred_region
          _
        $region32: #{model_forward.1} parent=11 // pred_fallthru
          _
        // Predicated region
        $region33: #{model_forward.1} parent=11 // pred_check
          %p338 = pneg %p212
        $region34: #{model_forward.1} parent=11 // pred_check_branch
          %340 = sbr.rel (%p338) target = $region36
        $region35: #{model_forward.1} parent=11 // pred_region
          _
        $region36: #{model_forward.1} parent=11 // pred_fallthru
          _
        // Predicated region
        $region37: #{model_forward.1} parent=11 // pred_check
          %p341 = pneg %p233
        $region38: #{model_forward.1} parent=11 // pred_check_branch
          %343 = sbr.rel (%p341) target = $region40
        $region39: #{model_forward.1} parent=11 // pred_region
          _
        $region40: #{model_forward.1} parent=11 // pred_fallthru
          _
        // Predicated region
        $region41: #{model_forward.1} parent=11 // pred_check
          %p344 = pneg %p254
        $region42: #{model_forward.1} parent=11 // pred_check_branch
          %346 = sbr.rel (%p344) target = $region44
        $region43: #{model_forward.1} parent=11 // pred_region
          _
        $region44: #{model_forward.1} parent=11 // pred_fallthru
          _
        // Predicated region
        $region45: #{model_forward.1} parent=11 // pred_check
          %p347 = pneg %p275
        $region46: #{model_forward.1} parent=11 // pred_check_branch
          %349 = sbr.rel (%p347) target = $region48
        $region47: #{model_forward.1} parent=11 // pred_region
          _
        $region48: #{model_forward.1} parent=11 // pred_fallthru
          _
      $region12: #{model_forward.1} parent=5 // pred_fallthru
        _
      %p350 = scmp.lt.s32.totalorder %s20, 8
      // Predicated region
      $region49: #{model_forward.1} parent=5 // pred_check
        %p351 = pneg %p350
      $region50: #{model_forward.1} parent=5 // pred_check_branch
        %353 = sbr.rel (%p351) target = $region52
      $region51: #{model_forward.1} parent=5 // pred_region
        // Predicated region
        $region53: #{model_forward.1} parent=51 // pred_check
          %p354 = pneg %p54
        $region54: #{model_forward.1} parent=51 // pred_check_branch
          %356 = sbr.rel (%p354) target = $region56
        $region55: #{model_forward.1} parent=51 // pred_region
          %p357 = scmp.lt.s32.totalorder %s28, 3
          %s358 = scalar_select %p357, %s28, 3
          %p359 = scmp.lt.s32.totalorder %s27, 1
          %s360 = scalar_select %p359, %s27, 1
          %s361 = smul.addr %s360, 2
          %s362 = smul.addr %s358, 4
          %s363 = sadd.s32 %s361, %s362
          %s364 = smul.addr %s363, 8
          %s365 = scalar_lea.vmem %s0, %s364
        $region56: #{model_forward.1} parent=51 // pred_fallthru
          _
        // Predicated region
        $region57: #{model_forward.1} parent=51 // pred_check
          %p366 = pneg %p80
        $region58: #{model_forward.1} parent=51 // pred_check_branch
          %368 = sbr.rel (%p366) target = $region60
        $region59: #{model_forward.1} parent=51 // pred_region
          %p369 = scmp.lt.s32.totalorder %s27, 1
          %s370 = scalar_select %p369, %s27, 1
          %s371 = smul.addr %s370, 2
          %s372 = smul.addr %s371, 4
          %s373 = scalar_lea.vmem %s1, %s372
        $region60: #{model_forward.1} parent=51 // pred_fallthru
          _
      $region52: #{model_forward.1} parent=5 // pred_fallthru
        _
      %p374 = scmp.le.s32.totalorder 1, %s20
      %p375 = scmp.lt.s32.totalorder %s20, 9
      %p376 = pnand %p374, %p375
      %p377 = pneg %p376
      // Predicated region
      $region61: #{model_forward.1} parent=5 // pred_check
        _
      $region62: #{model_forward.1} parent=5 // pred_check_branch
        %379 = sbr.rel (%p376) target = $region64
      $region63: #{model_forward.1} parent=5 // pred_region
        %s380 = ssub.s32 %s20, 1
        // Predicated region
        $region65: #{model_forward.1} parent=63 // pred_check
          %p381 = pneg %p107
        $region66: #{model_forward.1} parent=63 // pred_check_branch
          %383 = sbr.rel (%p381) target = $region68
        $region67: #{model_forward.1} parent=63 // pred_region
          %385 = dma.done [#allocation7], 32
        $region68: #{model_forward.1} parent=63 // pred_fallthru
          _
        %386 = sfence
        %p387 = scmp.lt.s32.totalorder %s30, 3
        %s388 = scalar_select %p387, %s30, 3
        %p389 = scmp.lt.s32.totalorder %s29, 1
        %s390 = scalar_select %p389, %s29, 1
        %s391 = smul.addr %s390, 2
        %s392 = smul.addr %s388, 4
        %s393 = sadd.s32 %s391, %s392
        %s394 = smul.addr %s393, 8
        %s395 = scalar_lea.vmem %s0, %s394
        %p396 = pneg %p60
        %p397 = pneg %p57
        %p398 = scmp.lt.s32.totalorder %s29, 1
        %s399 = scalar_select %p398, %s29, 1
        %s400 = smul.addr %s399, 2
        %s401 = smul.addr %s400, 4
        %s402 = scalar_lea.vmem %s1, %s401
        %p403 = pneg %p86
        %p404 = pneg %p83
        %p405 = pneg %p107
        %p406 = pneg %p104
        %p407 = pneg %p128
        %p408 = pneg %p125
        %p409 = pneg %p149
        %p410 = pneg %p146
        %p411 = pneg %p170
        %p412 = pneg %p167
        %p413 = pneg %p191
        %p414 = pneg %p188
        %p415 = pneg %p212
        %p416 = pneg %p209
        %p417 = pneg %p233
        %p418 = pneg %p230
        %p419 = pneg %p254
        %p420 = pneg %p251
        %p421 = pneg %p275
        %p422 = pneg %p272
        %p423 = pneg %p301
        %p424 = pneg %p298
        %p425 = scmp.lt.s32.totalorder %s29, 1
        %s426 = scalar_select %p425, %s29, 1
        %s427 = scalar_lea.vmem %s11, %s426
        %p428 = scmp.lt.s32.totalorder %s30, 3
        %s429 = scalar_select %p428, %s30, 3
        %p430 = scmp.lt.s32.totalorder %s29, 1
        %s431 = scalar_select %p430, %s29, 1
        %s432 = smul.addr %s431, 2
        %s433 = smul.addr %s429, 4
        %s434 = sadd.s32 %s432, %s433
        %s435 = smul.addr %s434, 8
        %s436 = scalar_lea.vmem %s0, %s435
        %p437 = scmp.lt.s32.totalorder %s29, 1
        %s438 = scalar_select %p437, %s29, 1
        %s439 = smul.addr %s438, 2
        %s440 = smul.addr %s439, 4
        %s441 = scalar_lea.vmem %s1, %s440
        %p442 = scmp.lt.s32.totalorder %s29, 1
        %s443 = scalar_select %p442, %s29, 1
        %s444 = scalar_lea.vmem %s11, %s443
        %p446 = scmp.eq.s32.totalorder %s30, 0
        // Predicated region
        $region69: #{model_forward.1} parent=63 // pred_check
          %p447 = pneg %p446
        $region70: #{model_forward.1} parent=63 // pred_check_branch
          %449 = sbr.rel (%p447) target = $region72
        $region71: #{model_forward.1} parent=63 // pred_region
          %vm450 = vcmask 261120
          %451 = vst.msk [vmem:[#allocation2] sm:$0xff] %vm450, 0.0
          %452 = vst.msk [vmem:[#allocation2 + $0x8] sm:$0xff] %vm450, 0.0
          %453 = vst.msk [vmem:[#allocation3] sm:$0xff] %vm450, 0.0
          %454 = vst.msk [vmem:[#allocation3 + $0x8] sm:$0xff] %vm450, 0.0
          %vm455 = vcmask 253952
          %456 = vst.msk [vmem:[#allocation4] sm:$0x1] %vm455, 0.0
        $region72: #{model_forward.1} parent=63 // pred_fallthru
          _
        %v457 = vld [vmem:[%s436] sm:$0xff]
        %v458 = vld [vmem:[%s436 + $0x8] sm:$0xff]
        %v459 = vld [vmem:[%s441] sm:$0xf]
        %v460 = vld [vmem:[%s441 + $0x4] sm:$0xf]
        %v461 = vld [vmem:[#allocation2] sm:$0xff]
        %v462 = vld [vmem:[#allocation2 + $0x8] sm:$0xff]
        %v463 = vld [vmem:[#allocation3] sm:$0xff]
        %v464 = vld [vmem:[#allocation3 + $0x8] sm:$0xff]
        %467 = vrot.lane.b32.xlu0 %v461, 16
        %v468 = vpop.permute.xlu0 %467
        %469 = vrot.lane.b32.xlu0 %v462, 16
        %v470 = vpop.permute.xlu0 %469
        %vm473 = vcmask 130048
        %v474 = vsel %vm473, %v457, %v468
        %v475 = vsel %vm473, %v458, %v470
        %v476 = vpack.c.bf16 %v475, %v474
        %v479 = vunpack.c.l.b16 %v459
        %v480 = vunpack.c.l.b16 %v460
        %v481 = vpack.c.b16 %v480, %v479
        %v483 = vsel %vm473, %v481, 0
        %485 = vmatpush.bf16.msra.mxu0 0
        %486 = vmatpush.bf16.msra.mxu0 0
        %487 = vmatpush.bf16.msra.mxu0 0
        %488 = vmatpush.bf16.msra.mxu0 0
        %489 = vmatpush.bf16.msra.mxu0 0
        %490 = vmatpush.bf16.msra.mxu0 0
        %491 = vmatpush.bf16.msra.mxu0 0
        %492 = vmatpush.bf16.msra.mxu0 %v476
        %493 = vmatmul.bf16.gmra.mxu0 %v483
        %v494 = vpop.f32.mrf.mxu0
        %v495 = vadd.f32 0.0, %v494
        %v496 = vpop.f32.mrf.mxu0
        %v497 = vadd.f32 0.0, %v496
        %498 = vdwg.mxu0
        %v499 = vpack.c.bf16 %v497, %v495
        %500 = vmatpush.bf16.msra.mxu0 0
        %501 = vmatpush.bf16.msra.mxu0 0
        %502 = vmatpush.bf16.msra.mxu0 0
        %503 = vmatpush.bf16.msra.mxu0 0
        %504 = vmatpush.bf16.msra.mxu0 0
        %505 = vmatpush.bf16.msra.mxu0 0
        %506 = vmatpush.bf16.msra.mxu0 0
        %507 = vmatpush.bf16.msra.mxu0 %v499
        %508 = vmatmul.bf16.gmra.mxu0 %v483
        %v509 = vpop.f32.mrf.mxu0
        %v510 = vadd.f32 0.0, %v509
        %v511 = vpop.f32.mrf.mxu0
        %v512 = vadd.f32 0.0, %v511
        %513 = vdwg.mxu0
        %v514 = vmul.f32 %v510, 2.0
        %v515 = vmul.f32 %v512, 2.0
        %v516 = vsub.f32 %v514, %v474
        %v517 = vsub.f32 %v515, %v475
        %520 = vrot.lane.b32.xlu0 %v495, 48
        %v521 = vpop.permute.xlu0 %520
        %522 = vrot.lane.b32.xlu0 %v497, 48
        %v523 = vpop.permute.xlu0 %522
        %528 = vrot.lane.b32.xlu0 %v516, 96
        %v529 = vpop.permute.xlu0 %528
        %530 = vrot.lane.b32.xlu0 %v517, 96
        %v531 = vpop.permute.xlu0 %530
        %vm534 = vcmask 392192
        %v535 = vsel %vm534, %v474, %v521
        %v536 = vsel %vm534, %v475, %v523
        %vm537 = vcmask 785408
        %v538 = vsel %vm537, %v535, %v529
        %v539 = vsel %vm537, %v536, %v531
        %v540 = vpack.c.bf16 %v539, %v538
        %v541 = vpack.c.bf16 %v531, %v529
        %v542 = vld [vmem:[%s3] sm:$0xf]
        %v543 = vld [vmem:[%s3 + $0x4] sm:$0xf]
        %v544 = vld [vmem:[%s3 + $0x8] sm:$0xf]
        %v545 = vld [vmem:[%s3 + $0xc] sm:$0xf]
        %v546 = vld [vmem:[%s3 + $0x10] sm:$0xf]
        %v547 = vld [vmem:[%s3 + $0x14] sm:$0xf]
        %v548 = vld [vmem:[%s3 + $0x18] sm:$0xf]
        %v549 = vld [vmem:[%s3 + $0x1c] sm:$0xf]
        %v550 = vld [vmem:[%s3 + $0x20] sm:$0xf]
        %v551 = vld [vmem:[%s3 + $0x24] sm:$0xf]
        %v552 = vld [vmem:[%s3 + $0x28] sm:$0xf]
        %v553 = vld [vmem:[%s3 + $0x2c] sm:$0xf]
        %v554 = vld [vmem:[%s3 + $0x30] sm:$0xf]
        %v555 = vld [vmem:[%s3 + $0x34] sm:$0xf]
        %v556 = vld [vmem:[%s3 + $0x38] sm:$0xf]
        %v557 = vld [vmem:[%s3 + $0x3c] sm:$0xf]
        %v558 = vld [vmem:[%s3 + $0x40] sm:$0xf]
        %v559 = vld [vmem:[%s3 + $0x44] sm:$0xf]
        %v560 = vld [vmem:[%s4] sm:$0x1]
        %v562 = vperm.slane %v560, 0
        %v582 = vunpack.c.l.b16 %v542
        %v583 = vunpack.c.l.b16 %v543
        %v584 = vunpack.c.l.b16 %v544
        %v585 = vunpack.c.l.b16 %v545
        %v586 = vunpack.c.l.b16 %v546
        %v587 = vunpack.c.l.b16 %v547
        %v588 = vunpack.c.l.b16 %v548
        %v589 = vunpack.c.l.b16 %v549
        %v590 = vunpack.c.l.b16 %v550
        %v591 = vunpack.c.l.b16 %v551
        %v592 = vunpack.c.l.b16 %v552
        %v593 = vunpack.c.l.b16 %v553
        %v594 = vunpack.c.l.b16 %v554
        %v595 = vunpack.c.l.b16 %v555
        %v596 = vunpack.c.l.b16 %v556
        %v597 = vunpack.c.l.b16 %v557
        %v598 = vunpack.c.l.b16 %v558
        %v599 = vunpack.c.l.b16 %v559
        %v600 = vpack.c.b16 %v583, %v582
        %v601 = vpack.c.b16 %v585, %v584
        %v602 = vpack.c.b16 %v587, %v586
        %v603 = vpack.c.b16 %v589, %v588
        %v604 = vpack.c.b16 %v591, %v590
        %v605 = vpack.c.b16 %v593, %v592
        %v606 = vpack.c.b16 %v595, %v594
        %v607 = vpack.c.b16 %v597, %v596
        %v608 = vpack.c.b16 %v599, %v598
        %v619 = vsel %vm473, %v541, 0
        %621 = vmatpush.bf16.msra.mxu0 %v607
        %622 = vmatpush.bf16.msra.mxu0 %v606
        %623 = vmatpush.bf16.msra.mxu0 %v605
        %624 = vmatpush.bf16.msra.mxu0 %v604
        %625 = vmatpush.bf16.msra.mxu0 %v603
        %626 = vmatpush.bf16.msra.mxu0 %v602
        %627 = vmatpush.bf16.msra.mxu0 %v601
        %628 = vmatpush.bf16.msra.mxu0 %v600
        %629 = vmatmul.bf16.gmra.mxu0 %v540
        %v630 = vpop.f32.mrf.mxu0
        %v631 = vadd.f32 %v562, %v630
        %v632 = vpop.f32.mrf.mxu0
        %v633 = vadd.f32 %v562, %v632
        %634 = vdwg.mxu0
        %635 = vmatpush.bf16.msra.mxu0 0
        %636 = vmatpush.bf16.msra.mxu0 0
        %637 = vmatpush.bf16.msra.mxu0 0
        %638 = vmatpush.bf16.msra.mxu0 0
        %639 = vmatpush.bf16.msra.mxu0 0
        %640 = vmatpush.bf16.msra.mxu0 0
        %641 = vmatpush.bf16.msra.mxu0 0
        %642 = vmatpush.bf16.msra.mxu0 %v608
        %643 = vmatmul.bf16.gmra.mxu0 %v619
        %v644 = vpop.f32.mrf.mxu0
        %v645 = vadd.f32 %v631, %v644
        %v646 = vpop.f32.mrf.mxu0
        %v647 = vadd.f32 %v633, %v646
        %648 = vdwg.mxu0
        %v649 = vxor.u32 %v645, 2147483648
        %v650 = vxor.u32 %v647, 2147483648
        %v651 = vmul.f32 %v649, 1.442695
        %v652 = vpow.pop %v651
        %v653 = vmul.f32 %v650, 1.442695
        %v654 = vpow.pop %v653
        %v655 = vadd.f32 %v652, 1.0
        %v656 = vadd.f32 %v654, 1.0
        %v657 = vrcp.pop %v655
        %v658 = vmul.f32 %v655, %v657
        %v659 = vsub.f32 1.0, %v658
        %v660 = vmul.f32 %v657, %v659
        %v661 = vadd.f32 %v657, %v660
        %vm662 = vweird.f32 %v655
        %vm663 = vweird.f32 %v657
        %vm664 = vmor %vm662, %vm663
        %v665 = vsel %vm664, %v657, %v661
        %v666 = vand.u32 2147483647, %v655
        %vm667 = vcmp.eq.f32.partialorder %v666, 8.507059e+37
        %v668 = vand.u32 %v655, 2147483648
        %v669 = vor.u32 1.1754944e-38, %v668
        %v670 = vsel %vm667, %v669, %v665
        %v671 = vmul.f32 1.0, %v670
        %v672 = vrcp.pop %v656
        %v673 = vmul.f32 %v656, %v672
        %v674 = vsub.f32 1.0, %v673
        %v675 = vmul.f32 %v672, %v674
        %v676 = vadd.f32 %v672, %v675
        %vm677 = vweird.f32 %v656
        %vm678 = vweird.f32 %v672
        %vm679 = vmor %vm677, %vm678
        %v680 = vsel %vm679, %v672, %v676
        %v681 = vand.u32 2147483647, %v656
        %vm682 = vcmp.eq.f32.partialorder %v681, 8.507059e+37
        %v683 = vand.u32 %v656, 2147483648
        %v684 = vor.u32 1.1754944e-38, %v683
        %v685 = vsel %vm682, %v684, %v680
        %v686 = vmul.f32 1.0, %v685
        %v687 = vtanh.pop %v645
        %v688 = vtanh.pop %v647
        %691 = vrot.lane.b32.xlu0 %v463, 32
        %v692 = vpop.permute.xlu0 %691
        %693 = vrot.lane.b32.xlu0 %v464, 32
        %v694 = vpop.permute.xlu0 %693
        %v697 = vmul.f32 %v671, %v692
        %v698 = vmul.f32 %v686, %v694
        %701 = vrot.lane.b32.xlu0 %v687, 32
        %v702 = vpop.permute.xlu0 %701
        %703 = vrot.lane.b32.xlu0 %v688, 32
        %v704 = vpop.permute.xlu0 %703
        %v707 = vmul.f32 %v671, %v702
        %v708 = vmul.f32 %v686, %v704
        %711 = vrot.lane.b32.xlu0 %v707, 32
        %v712 = vpop.permute.xlu0 %711
        %713 = vrot.lane.b32.xlu0 %v708, 32
        %v714 = vpop.permute.xlu0 %713
        %v717 = vadd.f32 %v697, %v712
        %v718 = vadd.f32 %v698, %v714
        %v719 = vtanh.pop %v717
        %v720 = vtanh.pop %v718
        %723 = vrot.lane.b32.xlu0 %v719, 32
        %v724 = vpop.permute.xlu0 %723
        %725 = vrot.lane.b32.xlu0 %v720, 32
        %v726 = vpop.permute.xlu0 %725
        %v729 = vmul.f32 %v671, %v724
        %v730 = vmul.f32 %v686, %v726
        %733 = vrot.lane.b32.xlu0 %v729, 64
        %v734 = vpop.permute.xlu0 %733
        %735 = vrot.lane.b32.xlu0 %v730, 64
        %v736 = vpop.permute.xlu0 %735
        %vm739 = vcmask 261120
        %740 = vst.msk [vmem:[#allocation2] sm:$0xff] %vm739, %v734
        %741 = vst.msk [vmem:[#allocation2 + $0x8] sm:$0xff] %vm739, %v736
        %744 = vrot.lane.b32.xlu0 %v717, 96
        %v745 = vpop.permute.xlu0 %744
        %746 = vrot.lane.b32.xlu0 %v718, 96
        %v747 = vpop.permute.xlu0 %746
        %750 = vst.msk [vmem:[#allocation3] sm:$0xff] %vm739, %v745
        %751 = vst.msk [vmem:[#allocation3 + $0x8] sm:$0xff] %vm739, %v747
        %s752 = sshra.s32 %s30, 7
        %s753 = sand.u32 %s30, 127
        %s754 = sadd.s32 %s752, %s29
        %s755 = smul.u32 %s754, 128
        %s756 = sshra.s32 %s30, 7
        %s757 = sand.u32 %s30, 127
        %s758 = sadd.s32 %s755, %s757
        %s759 = sld [smem:[#allocation6 + %s758]]
        %v760 = vld [vmem:[#allocation4] sm:$0x1]
        %vm761 = vcmask 785920
        %v762 = vsel %vm761, %v729, 0.0
        %v763 = vsel %vm761, %v730, 0.0
        %v764 = vadd.f32 %v762, %v763
        %v765 = vrot.slane %v764, 4
        %v766 = vadd.f32 %v764, %v765
        %v767 = vrot.slane %v766, 2
        %v768 = vadd.f32 %v766, %v767
        %v769 = vrot.slane %v768, 1
        %v770 = vadd.f32 %v768, %v769
        %v771 = vstv %s759
        %v772 = vmul.f32 %v771, %v770
        %774 = vrot.lane.b32.xlu0 %v772, 64
        %v775 = vpop.permute.xlu0 %774
        %v777 = vadd.f32 %v760, %v775
        %vm778 = vcmask 253952
        %779 = vst.msk [vmem:[#allocation4] sm:$0x1] %vm778, %v777
        %p780 = scmp.eq.s32.totalorder %s30, 3
        // Predicated region
        $region73: #{model_forward.1} parent=63 // pred_check
          %p781 = pneg %p780
        $region74: #{model_forward.1} parent=63 // pred_check_branch
          %783 = sbr.rel (%p781) target = $region76
        $region75: #{model_forward.1} parent=63 // pred_region
          %v784 = vld [vmem:[#allocation4] sm:$0x1]
          %v785 = vld [vmem:[%s5] sm:$0xff]
          %v786 = vld [vmem:[%s5 + $0x8] sm:$0xff]
          %v787 = vld [vmem:[%s5 + $0x10] sm:$0xff]
          %v788 = vld [vmem:[%s5 + $0x18] sm:$0xff]
          %v789 = vld [vmem:[%s6] sm:$0x1]
          %v791 = vsel %vm739, %v784, 0
          %793 = vmatpush.msra.mxu0 0.0
          %794 = vmatpush.msra.mxu0 0.0
          %795 = vmatpush.msra.mxu0 0.0
          %796 = vmatpush.msra.mxu0 0.0
          %797 = vmatpush.msra.mxu0 0.0
          %798 = vmatpush.msra.mxu0 0.0
          %799 = vmatpush.msra.mxu0 0.0
          %800 = vmatpush.msra.mxu0 0.0
          %801 = vmatpush.msra.mxu0 0.0
          %802 = vmatpush.msra.mxu0 0.0
          %803 = vmatpush.msra.mxu0 0.0
          %804 = vmatpush.msra.mxu0 0.0
          %805 = vmatpush.msra.mxu0 %v788
          %806 = vmatpush.msra.mxu0 %v787
          %807 = vmatpush.msra.mxu0 %v786
          %808 = vmatpush.msra.mxu0 %v785
          %809 = vmatmul.f32.gmra.mxu0 %v791
          %v810 = vpop.f32.mrf.mxu0
          %v811 = vadd.f32 %v789, %v810
          %812 = vdwg.mxu0
          %v813 = vmax.f32 %v811, 0.0
          %v814 = vld [vmem:[%s7] sm:$0xff]
          %v815 = vld [vmem:[%s7 + $0x8] sm:$0xff]
          %v816 = vld [vmem:[%s7 + $0x10] sm:$0xff]
          %v817 = vld [vmem:[%s7 + $0x18] sm:$0xff]
          %v818 = vld [vmem:[%s8] sm:$0x1]
          %v820 = vsel %vm739, %v813, 0
          %822 = vmatpush.msra.mxu0 0.0
          %823 = vmatpush.msra.mxu0 0.0
          %824 = vmatpush.msra.mxu0 0.0
          %825 = vmatpush.msra.mxu0 0.0
          %826 = vmatpush.msra.mxu0 0.0
          %827 = vmatpush.msra.mxu0 0.0
          %828 = vmatpush.msra.mxu0 0.0
          %829 = vmatpush.msra.mxu0 0.0
          %830 = vmatpush.msra.mxu0 0.0
          %831 = vmatpush.msra.mxu0 0.0
          %832 = vmatpush.msra.mxu0 0.0
          %833 = vmatpush.msra.mxu0 0.0
          %834 = vmatpush.msra.mxu0 %v817
          %835 = vmatpush.msra.mxu0 %v816
          %836 = vmatpush.msra.mxu0 %v815
          %837 = vmatpush.msra.mxu0 %v814
          %838 = vmatmul.f32.gmra.mxu0 %v820
          %v839 = vpop.f32.mrf.mxu0
          %v840 = vadd.f32 %v818, %v839
          %841 = vdwg.mxu0
          %v842 = vmax.f32 %v840, 0.0
          %v843 = vld [vmem:[%s9] sm:$0xff]
          %v844 = vld [vmem:[%s9 + $0x8] sm:$0xff]
          %v845 = vld [vmem:[#allocation5] sm:$0x1]
          %v847 = vsel %vm473, %v842, 0
          %849 = vmatpush.msra.mxu0 0.0
          %850 = vmatpush.msra.mxu0 0.0
          %851 = vmatpush.msra.mxu0 0.0
          %852 = vmatpush.msra.mxu0 0.0
          %853 = vmatpush.msra.mxu0 0.0
          %854 = vmatpush.msra.mxu0 0.0
          %855 = vmatpush.msra.mxu0 0.0
          %856 = vmatpush.msra.mxu0 0.0
          %857 = vmatpush.msra.mxu0 0.0
          %858 = vmatpush.msra.mxu0 0.0
          %859 = vmatpush.msra.mxu0 0.0
          %860 = vmatpush.msra.mxu0 0.0
          %861 = vmatpush.msra.mxu0 0.0
          %862 = vmatpush.msra.mxu0 0.0
          %863 = vmatpush.msra.mxu0 %v844
          %864 = vmatpush.msra.mxu0 %v843
          %865 = vmatmul.f32.gmra.mxu0 %v847
          %v866 = vpop.f32.mrf.mxu0
          %v867 = vadd.f32 %v845, %v866
          %868 = vdwg.mxu0
          %v869 = vmax.f32 %v867, 0.0
          %vm870 = vcmask 0
          %871 = vst.msk [vmem:[%s444] sm:$0x1] %vm870, %v869
        $region76: #{model_forward.1} parent=63 // pred_fallthru
          _
        %p872 = scmp.lt.s32.totalorder %s29, 1
        %s873 = scalar_select %p872, %s29, 1
        %s874 = scalar_lea.vmem %s11, %s873
        // Predicated region
        $region77: #{model_forward.1} parent=63 // pred_check
          %p875 = pneg %p298
        $region78: #{model_forward.1} parent=63 // pred_check_branch
          %877 = sbr.rel (%p875) target = $region80
        $region79: #{model_forward.1} parent=63 // pred_region
          _
        $region80: #{model_forward.1} parent=63 // pred_fallthru
          _
      $region64: #{model_forward.1} parent=5 // pred_fallthru
        _
      %p878 = scmp.le.s32.totalorder 2, %s20
      // Predicated region
      $region81: #{model_forward.1} parent=5 // pred_check
        %p879 = pneg %p878
      $region82: #{model_forward.1} parent=5 // pred_check_branch
        %881 = sbr.rel (%p879) target = $region84
      $region83: #{model_forward.1} parent=5 // pred_region
        %s882 = ssub.s32 %s20, 2
        // Predicated region
        $region85: #{model_forward.1} parent=83 // pred_check
          %p883 = pneg %p304
        $region86: #{model_forward.1} parent=83 // pred_check_branch
          %885 = sbr.rel (%p883) target = $region88
        $region87: #{model_forward.1} parent=83 // pred_region
          %p886 = scmp.lt.s32.totalorder %s31, 1
          %s887 = scalar_select %p886, %s31, 1
          %s888 = scalar_lea.vmem %s11, %s887
        $region88: #{model_forward.1} parent=83 // pred_fallthru
          _
      $region84: #{model_forward.1} parent=5 // pred_fallthru
        _
    $region6: #{model_forward.1} parent=1 // loop_footer
      %s24 = sadd.s32 1, %s20
    $region7: #{model_forward.1} parent=1 // loop_footer_branch
      %19 = sbr.rel target = $region3
    $region8: #{model_forward.1} parent=1 // loop_exit
      _
    %889 = vsyncpa [#allocation7], 1
    %s890 = scalar_lea.sflag [#allocation7], 1
    %891 = vsyncpa %s890, 1

</llo_original>
